<compile_context>
chip_gen: v7x
topology: tpu7x:2x2x1
jax: 0.10.0
libtpu: 0.0.40
codegen_flags: <defaults>
</compile_context>

<pallas_src>
import math

import jax
import jax.numpy as jnp
from jax import lax
from jax.experimental import pallas as pl
from jax.experimental.pallas import tpu as pltpu

_NN = (((1,), (0,)), ((), ()))   # a @ b


def _vmem_limit(tile_bytes):
    # double-buffered pipeline tiles + f32 temporaries + headroom; floored at the
    # v6e/v7x scoped default, capped below v7x's 64 MiB physical VMEM.
    need = 3 * tile_bytes + (4 << 20)
    return int(min(48 << 20, max(32 << 20, need)))


def _pick_batch_block(B, N, target_rows=256, max_unroll=16):
    """Batches per grid step: divides B, keeps the X block sublane-aligned, and
    builds >=target_rows effective MXU rows when possible."""
    best = None
    for bb in range(1, B + 1):
        if B % bb:
            continue
        if ((bb * N) % 8 != 0) and bb != B:
            continue
        if bb > max_unroll:
            continue
        best = bb
        if bb * N >= target_rows:
            break
    return best if best is not None else B


def _pick_mean_tile(B, max_tb=8):
    for tb in range(min(B, max_tb), 0, -1):
        if B % tb == 0:
            return tb
    return B


# ---------------------------------------------------------------------------
# mean aggregation: grid over output-row tiles, VPU numerator, no MXU matvec
# ---------------------------------------------------------------------------
def _mean_kernel(cai_ref, ca_all_ref, e_ref, o_ref):
    # cai:    (tb, Mn, 1)  center rows for this output-row tile (numerators)
    # ca_all: (B, Mn)      all center rows (denominators, tiny)
    # e:      (tb, Mn, D)
    # o:      (tb, B, D)   out[i, j, :] = (centerA_i @ E_i) / sum(centerA_j)
    tb = o_ref.shape[0]
    num = jnp.sum(cai_ref[...] * e_ref[...], axis=1)            # (tb, D) VPU
    den = jnp.sum(ca_all_ref[...], axis=1, keepdims=True)        # (B, 1)
    inv = 1.0 / den                                               # torch does not mask zeros here
    for i in range(tb):                                           # static unroll
        o_ref[i] = (num[i:i + 1, :] * inv).astype(o_ref.dtype)    # (B, D)


def node_aggregate_mean(E, A):
    """centerA = A[:, :1, :]; Ev = (centerA @ E) / centerA.sum(dim=2).

    Reproduces the PyTorch broadcast quirk: (B,1,D) / (B,1) -> (B, B, D) with
    Ev[i, j] = (A[i,0] @ E[i]) / sum(A[j,0])."""
    B, Mn, D = E.shape
    itemsize = jnp.dtype(E.dtype).itemsize
    center = A[:, 0, :].astype(E.dtype)                          # (B, Mn) dense
    center3 = center[:, :, None]                                  # (B, Mn, 1)
    tb = _pick_mean_tile(B)
    tile_bytes = (tb * Mn + B * Mn + tb * Mn * D + tb * B * D) * itemsize
    return pl.pallas_call(
        _mean_kernel,
        out_shape=jax.ShapeDtypeStruct((B, B, D), E.dtype),
        grid=(B // tb,),
        in_specs=[
            pl.BlockSpec((tb, Mn, 1), lambda i: (i, 0, 0)),
            pl.BlockSpec((B, Mn), lambda i: (0, 0)),
            pl.BlockSpec((tb, Mn, D), lambda i: (i, 0, 0)),
        ],
        out_specs=pl.BlockSpec((tb, B, D), lambda i: (i, 0, 0)),
        compiler_params=pltpu.CompilerParams(
            dimension_semantics=("parallel",),
            vmem_limit_bytes=_vmem_limit(tile_bytes)),
    )(center3, center, E)


# ---------------------------------------------------------------------------
# attention aggregation: fused AttentionEdgeLayer, BB batches per grid step
# ---------------------------------------------------------------------------
def _attn_kernel(x_ref, w_ref, wa_ref, a_ref, pn_ref, gm_ref, o_ref):
    # x:  (BB*N, Fin) bf16  node features for the BB batches of this step
    # w:  (Fin, F)    bf16  shared projection
    # wa: (Fin, 2)    bf16  folded attention vector [W@a1 | W@a2]
    # a:  (BB, M, N)  bf16  adjacency in its ORIGINAL layout (row m = output node)
    # pn: (2, N, N)   f32   static selectors  pn[p][j, n] = (j == (2n+p) % N)
    # gm: (2, M, M)   f32   static selectors  gm[p][m, j] = (j == (2m+p) % M)
    # o:  (BB, M, F)
    BB, M, N = a_ref.shape

    # One fused projection for all BB batches (bf16 operands, f32 accumulate).
    x2 = x_ref[...]
    Hb = lax.dot_general(x2, w_ref[...], _NN,
                         preferred_element_type=jnp.float32).astype(jnp.bfloat16)

    pn0, pn1 = pn_ref[0], pn_ref[1]
    gm0, gm1 = gm_ref[0], gm_ref[1]

    # Static masks realising the torch a_input row-interleave (shared by batches).
    im = lax.broadcasted_iota(jnp.int32, (M, N), 0)               # m index
    inn = lax.broadcasted_iota(jnp.int32, (M, N), 1)              # n index
    twok = 2 * (inn * M + im)                                     # 2*(n*M + m)
    mask_h0 = twok < (N * M)
    mask_h1 = (twok + 1) < (N * M)
    mcol = lax.broadcasted_iota(jnp.int32, (M, 1), 0)
    b0 = jnp.broadcast_to((2 * mcol) >= M, (M, N))
    b1 = jnp.broadcast_to((2 * mcol + 1) >= M, (M, N))

    for b in range(BB):                                           # static unroll
        xb = x2[b * N:(b + 1) * N, :]                             # (N, Fin)
        hb = Hb[b * N:(b + 1) * N, :]                             # (N, F)
        adj = a_ref[b]                                            # (M, N)

        # U[c, n] = X[n] . (W @ a_c)  -- computed straight from X (no H dep)
        u = lax.dot_general(wa_ref[...], xb, (((0,), (1,)), ((), ())),
                            preferred_element_type=jnp.float32)   # (2, N)

        # es/et: degree-normalised neighbourhood sums of hs/ht
        v = lax.dot_general(adj, u.astype(jnp.bfloat16), (((1,), (1,)), ((), ())),
                            preferred_element_type=jnp.float32)   # (M, 2)
        deg = jnp.sum(adj.astype(jnp.float32), axis=1, keepdims=True)
        deg = jnp.where(deg == 0.0, jnp.float32(1.0), deg)
        v = v / deg

        # exact a_input interleave via 0/1 selection matmuls (kept f32: exact,
        # negligible size) + iota masks
        es_p = lax.dot_general(gm0, v[:, 0:1], _NN,
                               preferred_element_type=jnp.float32)  # (M, 1)
        et_p = lax.dot_general(gm1, v[:, 1:2], _NN,
                               preferred_element_type=jnp.float32)  # (M, 1)
        u_e = lax.dot_general(u, pn0, _NN, preferred_element_type=jnp.float32)
        u_o = lax.dot_general(u, pn1, _NN, preferred_element_type=jnp.float32)
        hs_e = jnp.broadcast_to(u_e[0:1, :], (M, N))
        hs_o = jnp.broadcast_to(u_o[0:1, :], (M, N))
        ht_e = jnp.broadcast_to(u_e[1:2, :], (M, N))
        ht_o = jnp.broadcast_to(u_o[1:2, :], (M, N))

        t0 = jnp.where(mask_h0, jnp.where(b0, hs_o, hs_e),
                       jnp.broadcast_to(es_p, (M, N)))
        t1 = jnp.where(mask_h1, jnp.where(b1, ht_o, ht_e),
                       jnp.broadcast_to(et_p, (M, N)))
        sc = t0 + t1
        sc = jnp.where(sc > 0, sc, 0.01 * sc)                     # LeakyReLU(0.01)

        # masked softmax over m (sublane axis of the transposed score map), f32
        att = jnp.where(adj > 0, sc, jnp.float32(-1e12))
        att = att - jnp.max(att, axis=0, keepdims=True)
        z = jnp.exp(att)
        p = z * (1.0 / jnp.sum(z, axis=0, keepdims=True))          # exact divide

        # h'[m, f] = sum_n p[n, m] * H[n, f]  -- plain NN matmul, bf16 / f32 acc
        hp = lax.dot_general(p.astype(jnp.bfloat16), hb, _NN,
                             preferred_element_type=jnp.float32)   # (M, F)
        o_ref[b] = hp.astype(o_ref.dtype)


def attention_edge_layer(E, A, W, a_vec):
    """AttentionEdgeLayer.forward(X=E, A=A.transpose(-1,-2)) with A consumed in its
    ORIGINAL (B, M, N) layout (no HBM-side transpose is materialised)."""
    B, N, Fin = E.shape
    _, M, _ = A.shape
    F = W.shape[1]

    # fold the attention vector through W once (parameters only)
    a_mat = a_vec.reshape(2, F).T.astype(jnp.float32)             # columns [a1 | a2]
    Wa = W.astype(jnp.float32) @ a_mat                             # (Fin, 2)

    # bf16 streaming for everything the MXU touches (A is 0/1 -> exact in bf16)
    x2 = E.astype(jnp.bfloat16).reshape(B * N, Fin)
    a_b = A.astype(jnp.bfloat16)
    w_b = W.astype(jnp.bfloat16)
    wa_b = Wa.astype(jnp.bfloat16)

    # static selection matrices for the exact torch a_input interleave
    nn_ = jnp.arange(N)
    mm_ = jnp.arange(M)
    pn = jnp.stack([
        (nn_[:, None] == ((2 * nn_) % N)[None, :]).astype(jnp.float32),
        (nn_[:, None] == ((2 * nn_ + 1) % N)[None, :]).astype(jnp.float32),
    ])                                                             # (2, N, N)
    gm = jnp.stack([
        (((2 * mm_) % M)[:, None] == mm_[None, :]).astype(jnp.float32),
        (((2 * mm_ + 1) % M)[:, None] == mm_[None, :]).astype(jnp.float32),
    ])                                                             # (2, M, M)

    BB = _pick_batch_block(B, N)
    tile_bytes = (BB * N * Fin * 2 + Fin * F * 2 + Fin * 2 * 2
                  + BB * M * N * 2 + 2 * N * N * 4 + 2 * M * M * 4
                  + BB * M * F * 4                       # output tile
                  + BB * N * F * 4 + 8 * M * N * 4)      # f32 temporaries
    return pl.pallas_call(
        _attn_kernel,
        out_shape=jax.ShapeDtypeStruct((B, M, F), E.dtype),
        grid=(B // BB,),
        in_specs=[
            pl.BlockSpec((BB * N, Fin), lambda i: (i, 0)),
            pl.BlockSpec((Fin, F), lambda i: (0, 0)),
            pl.BlockSpec((Fin, 2), lambda i: (0, 0)),
            pl.BlockSpec((BB, M, N), lambda i: (i, 0, 0)),
            pl.BlockSpec((2, N, N), lambda i: (0, 0, 0)),
            pl.BlockSpec((2, M, M), lambda i: (0, 0, 0)),
        ],
        out_specs=pl.BlockSpec((BB, M, F), lambda i: (i, 0, 0)),
        compiler_params=pltpu.CompilerParams(
            dimension_semantics=("parallel",),
            vmem_limit_bytes=_vmem_limit(tile_bytes)),
    )(x2, w_b, wa_b, a_b, pn, gm)


# ---------------------------------------------------------------------------
# Module wrapper
# ---------------------------------------------------------------------------
class NodeAggregateLayer:
    def __init__(self, aggregate_type="mean", node_dim=256, key=None):
        self.aggregate_type = aggregate_type
        self.node_dim = node_dim
        if aggregate_type == "attention":
            key = jax.random.PRNGKey(0) if key is None else key
            kw, ka = jax.random.split(key)
            gain = 1.414
            # nn.init.xavier_uniform_ bounds (deterministic synthetic init)
            bw = gain * math.sqrt(6.0 / (node_dim + node_dim))
            ba = gain * math.sqrt(6.0 / (2 * node_dim + 1))
            self.W = jax.random.uniform(kw, (node_dim, node_dim), jnp.float32, -bw, bw)
            self.a = jax.random.uniform(ka, (2 * node_dim, 1), jnp.float32, -ba, ba)

    def __call__(self, E, A):
        if self.aggregate_type == "mean":
            return node_aggregate_mean(E, A)
        if self.aggregate_type == "attention":
            # torch transposes A before the attention layer; the kernel consumes
            # the original layout and flips its internal orientation instead.
            return attention_edge_layer(E, A, self.W, self.a)
        return E


# ---------------------------------------------------------------------------
# pure-JAX references (literal transliterations of the torch forward)
# ---------------------------------------------------------------------------
def _attention_ref(X, A_t, W, a):
    X, A_t = X.astype(jnp.float32), A_t.astype(jnp.float32)
    W, a = W.astype(jnp.float32), a.astype(jnp.float32)
    H = jnp.matmul(X, W)
    B, N, M = A_t.shape
    F = W.shape[1]
    degree = jnp.sum(A_t, axis=1)[..., None]
    degree = jnp.where(degree == 0, 1.0, degree)
    Em = jnp.matmul(jnp.swapaxes(A_t, -1, -2), H) / degree
    a_input = jnp.concatenate(
        [jnp.tile(H, (1, 1, M)).reshape(B, N * M, F), jnp.tile(Em, (1, N, 1))],
        axis=1).reshape(B, N, M, 2 * F)
    e = jnp.matmul(a_input, a)[..., 0]
    e = jnp.where(e > 0, e, 0.01 * e)
    att = jnp.where(A_t > 0, e, -1e12)
    att = jax.nn.softmax(att, axis=2)
    return jnp.matmul(jnp.swapaxes(att, -1, -2), H)


def _mean_ref(E, A):
    centerA = A[:, :1, :].astype(E.dtype)
    return jnp.matmul(centerA, E) / jnp.sum(centerA, axis=2)


# ---------------------------------------------------------------------------
if __name__ == "__main__":
    key = jax.random.PRNGKey(0)
    k1, k2, k3 = jax.random.split(key, 3)

    # E: (B, N, D) node features; A: (B, M, N) adjacency (original layout).
    B, M, N, D = 2, 8, 16, 32
    E = jax.random.normal(k1, (B, N, D), dtype=jnp.float32)
    A = (jax.random.uniform(k2, (B, M, N)) > 0.5).astype(jnp.float32)
    A = A.at[:, 0, :].set(1.0)   # nonzero center-row sums for the 'mean' divide

    def _rel_err(x, y):
        x = x.astype(jnp.float32)
        y = y.astype(jnp.float32)
        return float(jnp.sqrt(jnp.sum((x - y) ** 2))
                     / (jnp.sqrt(jnp.sum(y ** 2)) + 1e-9))

    # default config: aggregate_type='mean'  -> (B, B, D) (torch broadcast quirk)
    mean_layer = NodeAggregateLayer(aggregate_type="mean", node_dim=D)
    ev_mean = jax.block_until_ready(mean_layer(E, A))
    assert ev_mean.shape == (B, B, D)
    with jax.default_matmul_precision("float32"):
        ref_mean = _mean_ref(E, A)
    assert _rel_err(ev_mean, ref_mean) < 1e-4, _rel_err(ev_mean, ref_mean)

    # attention config (fused AttentionEdgeLayer kernel) -> (B, M, D)
    attn_layer = NodeAggregateLayer(aggregate_type="attention", node_dim=D, key=k3)
    ev_attn = jax.block_until_ready(attn_layer(E, A))
    assert ev_attn.shape == (B, M, D)
    with jax.default_matmul_precision("float32"):
        ref_attn = _attention_ref(E, jnp.swapaxes(A, -1, -2),
                                  attn_layer.W, attn_layer.a)
    # bf16 MXU operands vs the f32 reference -> a few % norm-relative error
    assert _rel_err(ev_attn, ref_attn) < 8e-2, _rel_err(ev_attn, ref_attn)

    print("KERNEL_OK")
</pallas_src>

<mosaic_0001>
module attributes {stable_mosaic.version = 11 : i64} {
  func.func @_mean_kernel(%arg0: i32, %arg1: memref<2x16x1xf32, #tpu.memory_space<vmem>>, %arg2: memref<2x16xf32, #tpu.memory_space<vmem>>, %arg3: memref<2x16x32xf32, #tpu.memory_space<vmem>>, %arg4: memref<2x2x32xf32, #tpu.memory_space<vmem>>) attributes {dimension_semantics = [#tpu.dimension_semantics<parallel>], iteration_bounds = array<i64: 1>, scalar_prefetch = 0 : i64, scratch_operands = 0 : i64, tpu.core_type = #tpu.core_type<tc>, window_params = [{transform_indices = @transform_0, window_bounds = array<i64: 2, 16, 1>}, {pipeline_mode = #tpu.pipeline_mode<synchronous>, transform_indices = @transform_1, window_bounds = array<i64: 2, 16>}, {transform_indices = @transform_2, window_bounds = array<i64: 2, 16, 32>}, {transform_indices = @transform_3, window_bounds = array<i64: 2, 2, 32>}]} {
    %c0 = arith.constant 0 : index
    %c0_0 = arith.constant 0 : index
    %c0_1 = arith.constant 0 : index
    %0 = vector.load %arg1[%c0, %c0_0, %c0_1] : memref<2x16x1xf32, #tpu.memory_space<vmem>>, vector<2x16x1xf32>
    %c0_2 = arith.constant 0 : index
    %c0_3 = arith.constant 0 : index
    %c0_4 = arith.constant 0 : index
    %1 = vector.load %arg3[%c0_2, %c0_3, %c0_4] : memref<2x16x32xf32, #tpu.memory_space<vmem>>, vector<2x16x32xf32>
    %2 = vector.broadcast %0 : vector<2x16x1xf32> to vector<2x16x32xf32>
    %3 = arith.mulf %2, %1 : vector<2x16x32xf32>
    %cst = arith.constant dense<0.000000e+00> : vector<2x32xf32>
    %4 = vector.multi_reduction <add>, %3, %cst [1] : vector<2x16x32xf32> to vector<2x32xf32>
    %c0_5 = arith.constant 0 : index
    %c0_6 = arith.constant 0 : index
    %5 = vector.load %arg2[%c0_5, %c0_6] : memref<2x16xf32, #tpu.memory_space<vmem>>, vector<2x16xf32>
    %cst_7 = arith.constant dense<0.000000e+00> : vector<2xf32>
    %6 = vector.multi_reduction <add>, %5, %cst_7 [1] : vector<2x16xf32> to vector<2xf32>
    %7 = vector.shape_cast %6 : vector<2xf32> to vector<2x1xf32>
    %cst_8 = arith.constant 1.000000e+00 : f32
    %8 = vector.broadcast %cst_8 : f32 to vector<2x1xf32>
    %9 = arith.divf %8, %7 : vector<2x1xf32>
    %10 = vector.extract_strided_slice %4 {offsets = [0, 0], sizes = [1, 32], strides = [1, 1]} : vector<2x32xf32> to vector<1x32xf32>
    %11 = vector.broadcast %10 : vector<1x32xf32> to vector<2x32xf32>
    %12 = vector.broadcast %9 : vector<2x1xf32> to vector<2x32xf32>
    %13 = arith.mulf %11, %12 : vector<2x32xf32>
    %c0_9 = arith.constant 0 : index
    %c0_10 = arith.constant 0 : index
    %c0_11 = arith.constant 0 : index
    %14 = vector.load %arg4[%c0_9, %c0_10, %c0_11] : memref<2x2x32xf32, #tpu.memory_space<vmem>>, vector<1x2x32xf32>
    %15 = vector.shape_cast %14 : vector<1x2x32xf32> to vector<2x32xf32>
    %16 = vector.shape_cast %13 : vector<2x32xf32> to vector<1x2x32xf32>
    tpu.vector_store %arg4[%c0_9, %c0_10, %c0_11], %16 {strides = array<i32>} : memref<2x2x32xf32, #tpu.memory_space<vmem>>, vector<1x2x32xf32>,
    %17 = vector.extract_strided_slice %4 {offsets = [1, 0], sizes = [1, 32], strides = [1, 1]} : vector<2x32xf32> to vector<1x32xf32>
    %18 = vector.broadcast %17 : vector<1x32xf32> to vector<2x32xf32>
    %19 = vector.broadcast %9 : vector<2x1xf32> to vector<2x32xf32>
    %20 = arith.mulf %18, %19 : vector<2x32xf32>
    %c1 = arith.constant 1 : index
    %c0_12 = arith.constant 0 : index
    %c0_13 = arith.constant 0 : index
    %21 = vector.load %arg4[%c1, %c0_12, %c0_13] : memref<2x2x32xf32, #tpu.memory_space<vmem>>, vector<1x2x32xf32>
    %22 = vector.shape_cast %21 : vector<1x2x32xf32> to vector<2x32xf32>
    %23 = vector.shape_cast %20 : vector<2x32xf32> to vector<1x2x32xf32>
    tpu.vector_store %arg4[%c1, %c0_12, %c0_13], %23 {strides = array<i32>} : memref<2x2x32xf32, #tpu.memory_space<vmem>>, vector<1x2x32xf32>,
    return
  }
  func.func @transform_0(%arg0: i32) -> (i32, i32, i32) {
    %c0_i32 = arith.constant 0 : i32
    %c0_i32_0 = arith.constant 0 : i32
    %c0_i32_1 = arith.constant 0 : i32
    return %arg0, %c0_i32, %c0_i32_0 : i32, i32, i32
  }
  func.func @transform_1(%arg0: i32) -> (i32, i32) {
    %c0_i32 = arith.constant 0 : i32
    %c0_i32_0 = arith.constant 0 : i32
    %c0_i32_1 = arith.constant 0 : i32
    return %c0_i32, %c0_i32_0 : i32, i32
  }
  func.func @transform_2(%arg0: i32) -> (i32, i32, i32) {
    %c0_i32 = arith.constant 0 : i32
    %c0_i32_0 = arith.constant 0 : i32
    %c0_i32_1 = arith.constant 0 : i32
    return %arg0, %c0_i32, %c0_i32_0 : i32, i32, i32
  }
  func.func @transform_3(%arg0: i32) -> (i32, i32, i32) {
    %c0_i32 = arith.constant 0 : i32
    %c0_i32_0 = arith.constant 0 : i32
    %c0_i32_1 = arith.constant 0 : i32
    return %arg0, %c0_i32, %c0_i32_0 : i32, i32, i32
  }
}

</mosaic_0001>

<llo_original>
// kernel: tpu_custom_call.1
$region0: #{tpu_custom_call.1}
  #allocation0 [shape = 'u32[]', space=smem, size = 0x4, offset = 0x4, fixed_abs, tag = 'smem constant byte address 0x4 - core index']
  #allocation1 [shape = 'u32[144,128]{1,0:T(1,128)}', space=vmem, size = 0x12000, scoped, tag = 'internal scratch']
  %s0 = inlined_call_operand.vmem [shape: f32[2,16,1], index: 0, kind: input, shape index: {}]
  %s1 = inlined_call_operand.vmem [shape: f32[2,16], index: 1, kind: input, shape index: {}]
  %s2 = inlined_call_operand.vmem [shape: f32[2,16,32], index: 2, kind: input, shape index: {}]
  %s3 = inlined_call_operand.hbm [shape: f32[2,2,32], index: 3, kind: output, shape index: {}]
  %s4 = sld [smem:[#allocation0]]
  $region22: #{tpu_custom_call.1} parent=0
    _
  %s6 = ssub.s32 1, %s4
  %s7 = scalar_select 0, %s6, %s4
  $region1: #{tpu_custom_call.1} parent=0
    #allocation2 [shape = 'u8[2048]{0}', space=vmem, size = 0x800, scoped, tag = 'output window, operand 0, single buffered']
    #allocation3 [shape = 's32[1]{0}', space=sflag, size = 0x4, scoped, tag = 'scoped memory for tpu_custom_call.1']
    %8 = vsyncpa [#allocation3], 0
    // Predicated region
    $region2: #{tpu_custom_call.1} parent=1 // pred_check
      _
    $region3: #{tpu_custom_call.1} parent=1 // pred_check_branch
      %10 = sbr.rel (0) target = $region5
    $region4: #{tpu_custom_call.1} parent=1 // pred_region
      _
    $region5: #{tpu_custom_call.1} parent=1 // pred_fallthru
      _
    // Predicated region
    $region6: #{tpu_custom_call.1} parent=1 // pred_check
      _
    $region7: #{tpu_custom_call.1} parent=1 // pred_check_branch
      %12 = sbr.rel (0) target = $region9
    $region8: #{tpu_custom_call.1} parent=1 // pred_region
      _
    $region9: #{tpu_custom_call.1} parent=1 // pred_fallthru
      _
    // Predicated region
    $region10: #{tpu_custom_call.1} parent=1 // pred_check
      _
    $region11: #{tpu_custom_call.1} parent=1 // pred_check_branch
      %14 = sbr.rel (0) target = $region13
    $region12: #{tpu_custom_call.1} parent=1 // pred_region
      _
    $region13: #{tpu_custom_call.1} parent=1 // pred_fallthru
      _
    %v15 = vld [vmem:[%s0] sm:$0xff]
    %v16 = vld [vmem:[%s0 + $0x8] sm:$0xff]
    %v17 = vld [vmem:[%s0 + $0x10] sm:$0xff]
    %v18 = vld [vmem:[%s0 + $0x18] sm:$0xff]
    %v19 = vld [vmem:[%s2] sm:$0xff]
    %v20 = vld [vmem:[%s2 + $0x8] sm:$0xff]
    %v21 = vld [vmem:[%s2 + $0x10] sm:$0xff]
    %v22 = vld [vmem:[%s2 + $0x18] sm:$0xff]
    %24 = vset.pattern.permute.xlu0 0
    %25 = vperm.xlu0 %24, %v15
    %v26 = vpop.permute.xlu0 %25
    %29 = vset.pattern.permute.xlu0 0
    %30 = vperm.xlu0 %29, %v16
    %v31 = vpop.permute.xlu0 %30
    %34 = vset.pattern.permute.xlu0 0
    %35 = vperm.xlu0 %34, %v17
    %v36 = vpop.permute.xlu0 %35
    %39 = vset.pattern.permute.xlu0 0
    %40 = vperm.xlu0 %39, %v18
    %v41 = vpop.permute.xlu0 %40
    %v43 = vmul.f32 %v26, %v19
    %v44 = vmul.f32 %v31, %v20
    %v45 = vmul.f32 %v36, %v21
    %v46 = vmul.f32 %v41, %v22
    %vm47 = vcmask 261120
    %v48 = vsel %vm47, %v43, 0.0
    %v49 = vsel %vm47, %v44, 0.0
    %v50 = vadd.f32 %v48, %v49
    %v51 = vrot.slane %v50, 4
    %v52 = vadd.f32 %v50, %v51
    %v53 = vrot.slane %v52, 2
    %v54 = vadd.f32 %v52, %v53
    %v55 = vrot.slane %v54, 1
    %v56 = vadd.f32 %v54, %v55
    %v57 = vsel %vm47, %v45, 0.0
    %v58 = vsel %vm47, %v46, 0.0
    %v59 = vadd.f32 %v57, %v58
    %v60 = vrot.slane %v59, 4
    %v61 = vadd.f32 %v59, %v60
    %v62 = vrot.slane %v61, 2
    %v63 = vadd.f32 %v61, %v62
    %v64 = vrot.slane %v63, 1
    %v65 = vadd.f32 %v63, %v64
    %v66 = vld [vmem:[%s1] sm:$0x3]
    %vm67 = vcmask 123904
    %v68 = vsel %vm67, %v66, 0.0
    %69 = vadd.xlane.f32.xlu0 %v68
    %v70 = vpop.xlane.xlu0 %69
    %v71 = vrcp.pop %v70
    %v72 = vmul.f32 1.0, %v71
    %v73 = vmul.f32 %v56, %v72
    %vm74 = vcmask 254976
    %75 = vst.msk [vmem:[#allocation2] sm:$0x3] %vm74, %v73
    %v76 = vmul.f32 %v65, %v72
    %s77 = scalar_lea.vmem [#allocation2], 2
    %78 = vst.msk [vmem:[%s77] sm:$0x3] %vm74, %v76
    // Predicated region
    $region14: #{tpu_custom_call.1} parent=1 // pred_check
      _
    $region15: #{tpu_custom_call.1} parent=1 // pred_check_branch
      %80 = sbr.rel (0) target = $region17
    $region16: #{tpu_custom_call.1} parent=1 // pred_region
      %s82 = ssub.s32 64, 64
      %83 = vsyncadd [#allocation3], %s82
      %s84 = sshll.u32 [#allocation2], 4
      %s85 = int_to_ptr.vmem [resolvable:$true] %s84
      %90 = dma.vmem_to_hbm [thread:$0]  %s85, 64, %s3, [#allocation3], 32, 32, 2
    $region17: #{tpu_custom_call.1} parent=1 // pred_fallthru
      _
    // Predicated region
    $region18: #{tpu_custom_call.1} parent=1 // pred_check
      _
    $region19: #{tpu_custom_call.1} parent=1 // pred_check_branch
      %92 = sbr.rel (0) target = $region21
    $region20: #{tpu_custom_call.1} parent=1 // pred_region
      %93 = dma.done [#allocation3], 64
    $region21: #{tpu_custom_call.1} parent=1 // pred_fallthru
      _
    %94 = vsyncpa [#allocation3], 1

</llo_original>
